<compile_context>
chip_gen: v5e
topology: v5e:2x2
jax: 0.10.0
libtpu: 0.0.40
codegen_flags: <defaults>
</compile_context>

<pallas_src>
import functools

import jax
import jax.numpy as jnp
from jax.experimental import pallas as pl
from jax.experimental.pallas import tpu as pltpu

_MIN_LANE = 128   # vreg lane width / minimum MXU column granularity
_ROW_ALIGN = 16   # batch-tile row alignment (bf16 sublane pack; fine for f32 too)


def _round_up(n: int, m: int) -> int:
    return ((n + m - 1) // m) * m


def _align_down(n: int, m: int) -> int:
    return max(m, (n // m) * m)


@functools.lru_cache(maxsize=1)
def _tpu_config():
    """(generation, vmem_capacity_bytes, num_tensorcores) with robust fallbacks."""
    gen = 0
    try:
        kind = jax.devices()[0].device_kind.lower()
        if "v7" in kind or "7x" in kind:
            gen = 7
        else:
            for g in (6, 5, 4):
                if f"v{g}" in kind:
                    gen = g
                    break
    except Exception:
        pass
    vmem = None
    try:
        vmem = int(pltpu.get_tpu_info().vmem_capacity_bytes)
    except Exception:
        vmem = None
    if vmem is None or vmem <= 0:
        # Known 128 MiB parts; conservative 64 MiB for v7x/unknown.
        vmem = 128 * 1024 * 1024 if gen in (4, 5, 6) else 64 * 1024 * 1024
    num_tc = 2 if gen >= 7 else 1
    return gen, vmem, num_tc


def _pad_feature(n: int, gen: int):
    """Lane-dense padding: 256 on v6e/v7x when the dim is already >= 256."""
    align = 256 if (gen >= 6 and n >= 256) else _MIN_LANE
    return _round_up(n, align), align


def _mlp_kernel(x_ref, w1_ref, b1_ref, w2_ref, b2_ref, o_ref, acc_ref):
    # x_ref : (tile_b, D_in) f32    w1_ref: (D_in, tile_h) bf16   b1_ref: (1, tile_h) f32
    # w2_ref: (tile_h, O_p)  bf16   b2_ref: (1, O_p)       f32
    # o_ref : (tile_b, O_p)         acc_ref: (tile_b, O_p) f32 scratch
    hk = pl.program_id(1)

    @pl.when(hk == 0)
    def _init():
        acc_ref[...] = jnp.zeros_like(acc_ref)

    # In-kernel bf16 cast of x (VPU work hidden under the MXU); f32 accumulation.
    x_bf16 = x_ref[...].astype(jnp.bfloat16)
    h = jnp.dot(x_bf16, w1_ref[...], preferred_element_type=jnp.float32)
    h = jnp.maximum(h + b1_ref[...], 0.0)                       # bias + ReLU in f32
    acc_ref[...] += jnp.dot(h.astype(jnp.bfloat16), w2_ref[...],
                            preferred_element_type=jnp.float32)

    @pl.when(hk == pl.num_programs(1) - 1)
    def _finalize():
        o_ref[...] = (acc_ref[...] + b2_ref[...]).astype(o_ref.dtype)


def _choose_tiles(b_aligned, d_in, h_p, o_p, h_lane, out_itemsize, gen, vmem_cap, num_tc):
    """Generation-aware tile selection. Returns (tile_b, tile_h, weight_bytes, per_row)."""
    budget = (vmem_cap * 72) // 100             # ~92 MiB on 128 MiB parts, ~46 MiB on v7x
    min_rows = 256 if gen >= 6 else 128         # MXU M-dimension fill target

    # Hidden (reduction) tile: largest multiple of h_lane dividing h_p whose
    # (worst-case double-buffered) bf16 weight slabs fit half the budget.
    weight_budget = budget // 2
    n = h_p // h_lane
    tile_h = h_lane
    for d in range(1, n + 1):
        if n % d:
            continue
        t = h_p // d
        w_bytes = 2 * 2 * (d_in * t + t * o_p) + 2 * 4 * (t + o_p)
        if w_bytes <= weight_budget:
            tile_h = t
            break
    weight_bytes = 2 * 2 * (d_in * tile_h + tile_h * o_p) + 2 * 4 * (tile_h + o_p)

    # Batch tile: the largest 16-row-aligned tile that fits the remaining budget.
    per_row = (2 * d_in * 4                # x tile, f32, double-buffered
               + 2 * o_p * out_itemsize    # out tile, double-buffered
               + o_p * 4                   # f32 accumulator scratch
               + tile_h * 6)               # h intermediate (f32 + bf16 temporaries)
    remaining = max(budget - weight_bytes, _ROW_ALIGN * per_row)
    tile_b = min(b_aligned, _align_down(remaining // per_row, _ROW_ALIGN))

    # v7x only: shard the batch grid across both TensorCores, but only when the
    # batch is big enough for >= 2 MXU-sized steps per core; otherwise one big
    # tile (no duplicated weight DMA, no per-step overhead).
    if num_tc > 1 and b_aligned >= 2 * num_tc * min_rows:
        tile_b = min(tile_b,
                     max(min_rows, _align_down(b_aligned // (2 * num_tc), _ROW_ALIGN)))

    return tile_b, tile_h, weight_bytes, per_row


def _build_call(b_pad, tile_b, d_in, h_p, tile_h, o_p, out_dtype, vmem_cap, vmem_est):
    grid = (b_pad // tile_b, h_p // tile_h)
    out_itemsize = jnp.dtype(out_dtype).itemsize

    # Leave headroom below physical VMEM (esp. v7x's 64 MiB/TC); never below the
    # 32 MiB default scoped limit.
    vmem_limit = int(min((vmem_cap * 7) // 8,
                         max(32 * 1024 * 1024, 2 * vmem_est)))

    flops = 2 * b_pad * (d_in * h_p + h_p * o_p)
    bytes_accessed = (b_pad * d_in * 4
                      + (d_in * h_p + h_p * o_p) * 2
                      + (h_p + o_p) * 4
                      + b_pad * o_p * out_itemsize)

    return pl.pallas_call(
        _mlp_kernel,
        out_shape=jax.ShapeDtypeStruct((b_pad, o_p), out_dtype),
        grid_spec=pltpu.PrefetchScalarGridSpec(
            num_scalar_prefetch=0,
            grid=grid,
            in_specs=[
                pl.BlockSpec((tile_b, d_in), lambda i, k: (i, 0)),   # x (f32, streamed over batch)
                pl.BlockSpec((d_in, tile_h), lambda i, k: (0, k)),   # W1 (bf16)
                pl.BlockSpec((1, tile_h),    lambda i, k: (0, k)),   # b1 (f32)
                pl.BlockSpec((tile_h, o_p),  lambda i, k: (k, 0)),   # W2 (bf16)
                pl.BlockSpec((1, o_p),       lambda i, k: (0, 0)),   # b2 (f32)
            ],
            out_specs=pl.BlockSpec((tile_b, o_p), lambda i, k: (i, 0)),
            scratch_shapes=[pltpu.VMEM((tile_b, o_p), jnp.float32)],
        ),
        compiler_params=pltpu.CompilerParams(
            dimension_semantics=("parallel", "arbitrary"),
            vmem_limit_bytes=vmem_limit,
        ),
        cost_estimate=pl.CostEstimate(
            flops=flops, transcendentals=0, bytes_accessed=bytes_accessed),
    )


class PallasMLP:
    """Linear(in->hidden) -> ReLU -> Linear(hidden->out), fused in one pallas_call.

    Weights are padded and cast to bf16 ONCE here (they stay on device); each
    forward call only streams the f32 activations through the kernel.
    """

    def __init__(self, w1, b1, w2, b2):
        self.d_in, self.h = w1.shape
        self.o = w2.shape[1]
        gen, vmem_cap, num_tc = _tpu_config()
        self._gen, self._vmem_cap, self._num_tc = gen, vmem_cap, num_tc
        self.h_p, self._h_lane = _pad_feature(self.h, gen)
        self.o_p, _ = _pad_feature(self.o, gen)
        # One-time pad + cast; zero padding keeps the math exact for real rows/cols.
        self.w1_p = jnp.pad(jnp.asarray(w1, jnp.float32),
                            ((0, 0), (0, self.h_p - self.h))).astype(jnp.bfloat16)
        self.w2_p = jnp.pad(jnp.asarray(w2, jnp.float32),
                            ((0, self.h_p - self.h), (0, self.o_p - self.o))).astype(jnp.bfloat16)
        self.b1_p = jnp.pad(jnp.asarray(b1, jnp.float32),
                            (0, self.h_p - self.h)).reshape(1, self.h_p)
        self.b2_p = jnp.pad(jnp.asarray(b2, jnp.float32),
                            (0, self.o_p - self.o)).reshape(1, self.o_p)

    def __call__(self, x):
        B, d_in = x.shape
        assert d_in == self.d_in, "feature-dim mismatch"
        out_dtype = x.dtype
        out_itemsize = jnp.dtype(out_dtype).itemsize

        b_aligned = _round_up(B, _ROW_ALIGN)
        tile_b, tile_h, weight_bytes, per_row = _choose_tiles(
            b_aligned, self.d_in, self.h_p, self.o_p, self._h_lane,
            out_itemsize, self._gen, self._vmem_cap, self._num_tc)
        b_pad = _round_up(b_aligned, tile_b)
        if b_pad != B:   # only ragged batches pay a (small) pad; zero rows are sliced off
            x = jnp.pad(x, ((0, b_pad - B), (0, 0)))

        vmem_est = weight_bytes + tile_b * per_row
        call = _build_call(b_pad, tile_b, self.d_in, self.h_p, tile_h,
                           self.o_p, out_dtype, self._vmem_cap, vmem_est)
        out_padded = call(x, self.w1_p, self.b1_p, self.w2_p, self.b2_p)
        return out_padded[:B, :self.o]


def reference_forward(x, w1, b1, w2, b2):
    h = jnp.maximum(x @ w1 + b1, 0.0)
    return h @ w2 + b2


def reference_forward_bf16(x, w1, b1, w2, b2):
    # Mirrors the kernel's bf16-operand / f32-accumulation numerics.
    h = jnp.dot(x.astype(jnp.bfloat16), w1.astype(jnp.bfloat16),
                preferred_element_type=jnp.float32)
    h = jnp.maximum(h + b1, 0.0)
    y = jnp.dot(h.astype(jnp.bfloat16), w2.astype(jnp.bfloat16),
                preferred_element_type=jnp.float32)
    return y + b2


if __name__ == "__main__":
    # Small shapes consistent with Model(input_shape, hidden_units, output_shape).
    B, D_in, H, O = 16, 32, 64, 16

    key = jax.random.PRNGKey(0)
    kx, kw1, kb1, kw2, kb2 = jax.random.split(key, 5)

    x = jax.random.normal(kx, (B, D_in), dtype=jnp.float32)

    # Deterministic PyTorch-style uniform init.
    lim1 = 1.0 / jnp.sqrt(jnp.float32(D_in))
    w1 = jax.random.uniform(kw1, (D_in, H), minval=-lim1, maxval=lim1, dtype=jnp.float32)
    b1 = jax.random.uniform(kb1, (H,), minval=-lim1, maxval=lim1, dtype=jnp.float32)
    lim2 = 1.0 / jnp.sqrt(jnp.float32(H))
    w2 = jax.random.uniform(kw2, (H, O), minval=-lim2, maxval=lim2, dtype=jnp.float32)
    b2 = jax.random.uniform(kb2, (O,), minval=-lim2, maxval=lim2, dtype=jnp.float32)

    model = PallasMLP(w1, b1, w2, b2)   # one-time weight pad/cast
    out = jax.block_until_ready(model(x))
    assert out.shape == (B, O)

    ref_bf16 = reference_forward_bf16(x, w1, b1, w2, b2)
    ref_f32 = reference_forward(x, w1, b1, w2, b2)
    assert jnp.allclose(out, ref_bf16, atol=1e-2, rtol=1e-2), "mismatch vs bf16 reference"
    assert jnp.allclose(out, ref_f32, atol=5e-2, rtol=5e-2), "mismatch vs f32 reference"

    print("KERNEL_OK")
</pallas_src>

<mosaic_0001>
module attributes {stable_mosaic.version = 11 : i64} {
  func.func @_mlp_kernel(%arg0: i32, %arg1: i32, %arg2: memref<16x32xf32, #tpu.memory_space<vmem>>, %arg3: memref<32x128xbf16, #tpu.memory_space<vmem>>, %arg4: memref<1x128xf32, #tpu.memory_space<vmem>>, %arg5: memref<128x128xbf16, #tpu.memory_space<vmem>>, %arg6: memref<1x128xf32, #tpu.memory_space<vmem>>, %arg7: memref<16x128xf32, #tpu.memory_space<vmem>>, %arg8: memref<16x128xf32, #tpu.memory_space<vmem>>) attributes {dimension_semantics = [#tpu.dimension_semantics<parallel>, #tpu.dimension_semantics<arbitrary>], iteration_bounds = array<i64: 1, 1>, scalar_prefetch = 0 : i64, scratch_operands = 1 : i64, tpu.core_type = #tpu.core_type<tc>, window_params = [{transform_indices = @transform_0, window_bounds = array<i64: 16, 32>}, {transform_indices = @transform_1, window_bounds = array<i64: 32, 128>}, {transform_indices = @transform_2, window_bounds = array<i64: 1, 128>}, {transform_indices = @transform_3, window_bounds = array<i64: 128, 128>}, {pipeline_mode = #tpu.pipeline_mode<synchronous>, transform_indices = @transform_4, window_bounds = array<i64: 1, 128>}, {transform_indices = @transform_5, window_bounds = array<i64: 16, 128>}]} {
    %c0_i32 = arith.constant 0 : i32
    %0 = arith.cmpi eq, %arg1, %c0_i32 : i32
    %1 = arith.extui %0 : i1 to i32
    %c0_i32_0 = arith.constant 0 : i32
    %2 = arith.cmpi ne, %1, %c0_i32_0 : i32
    scf.if %2 {
      %cst_16 = arith.constant 0.000000e+00 : f32
      %21 = vector.broadcast %cst_16 : f32 to vector<16x128xf32>
      %c0_17 = arith.constant 0 : index
      %c0_18 = arith.constant 0 : index
      %22 = vector.load %arg8[%c0_17, %c0_18] : memref<16x128xf32, #tpu.memory_space<vmem>>, vector<16x128xf32>
      tpu.vector_store %arg8[%c0_17, %c0_18], %21 {strides = array<i32>} : memref<16x128xf32, #tpu.memory_space<vmem>>, vector<16x128xf32>,
    } else {
    }
    %c0 = arith.constant 0 : index
    %c0_1 = arith.constant 0 : index
    %3 = vector.load %arg2[%c0, %c0_1] : memref<16x32xf32, #tpu.memory_space<vmem>>, vector<16x32xf32>
    %4 = arith.truncf %3 : vector<16x32xf32> to vector<16x32xbf16>
    %c0_2 = arith.constant 0 : index
    %c0_3 = arith.constant 0 : index
    %5 = vector.load %arg3[%c0_2, %c0_3] : memref<32x128xbf16, #tpu.memory_space<vmem>>, vector<32x128xbf16>
    %cst = arith.constant dense<0.000000e+00> : vector<16x128xf32>
    %6 = tpu.matmul %4, %5, %cst {dimension_numbers = #tpu.dot_dimension_numbers<[1], [0], [0], [1], [0, 0, 1, 1], [], []>} : vector<16x32xbf16>, vector<32x128xbf16>, vector<16x128xf32> -> vector<16x128xf32>
    %c0_4 = arith.constant 0 : index
    %c0_5 = arith.constant 0 : index
    %7 = vector.load %arg4[%c0_4, %c0_5] : memref<1x128xf32, #tpu.memory_space<vmem>>, vector<1x128xf32>
    %8 = vector.broadcast %7 : vector<1x128xf32> to vector<16x128xf32>
    %9 = arith.addf %6, %8 : vector<16x128xf32>
    %cst_6 = arith.constant 0.000000e+00 : f32
    %10 = vector.broadcast %cst_6 : f32 to vector<16x128xf32>
    %11 = arith.maximumf %9, %10 : vector<16x128xf32>
    %c0_7 = arith.constant 0 : index
    %c0_8 = arith.constant 0 : index
    %12 = vector.load %arg8[%c0_7, %c0_8] : memref<16x128xf32, #tpu.memory_space<vmem>>, vector<16x128xf32>
    %13 = arith.truncf %11 : vector<16x128xf32> to vector<16x128xbf16>
    %c0_9 = arith.constant 0 : index
    %c0_10 = arith.constant 0 : index
    %14 = vector.load %arg5[%c0_9, %c0_10] : memref<128x128xbf16, #tpu.memory_space<vmem>>, vector<128x128xbf16>
    %cst_11 = arith.constant dense<0.000000e+00> : vector<16x128xf32>
    %15 = tpu.matmul %13, %14, %cst_11 {dimension_numbers = #tpu.dot_dimension_numbers<[1], [0], [0], [1], [0, 0, 1, 1], [], []>} : vector<16x128xbf16>, vector<128x128xbf16>, vector<16x128xf32> -> vector<16x128xf32>
    %16 = arith.addf %12, %15 : vector<16x128xf32>
    %c0_12 = arith.constant 0 : index
    %c0_13 = arith.constant 0 : index
    %17 = vector.load %arg8[%c0_12, %c0_13] : memref<16x128xf32, #tpu.memory_space<vmem>>, vector<16x128xf32>
    tpu.vector_store %arg8[%c0_12, %c0_13], %16 {strides = array<i32>} : memref<16x128xf32, #tpu.memory_space<vmem>>, vector<16x128xf32>,
    %c0_i32_14 = arith.constant 0 : i32
    %18 = arith.cmpi eq, %arg1, %c0_i32_14 : i32
    %19 = arith.extui %18 : i1 to i32
    %c0_i32_15 = arith.constant 0 : i32
    %20 = arith.cmpi ne, %19, %c0_i32_15 : i32
    scf.if %20 {
      %c0_16 = arith.constant 0 : index
      %c0_17 = arith.constant 0 : index
      %21 = vector.load %arg8[%c0_16, %c0_17] : memref<16x128xf32, #tpu.memory_space<vmem>>, vector<16x128xf32>
      %c0_18 = arith.constant 0 : index
      %c0_19 = arith.constant 0 : index
      %22 = vector.load %arg6[%c0_18, %c0_19] : memref<1x128xf32, #tpu.memory_space<vmem>>, vector<1x128xf32>
      %23 = vector.broadcast %22 : vector<1x128xf32> to vector<16x128xf32>
      %24 = arith.addf %21, %23 : vector<16x128xf32>
      %c0_20 = arith.constant 0 : index
      %c0_21 = arith.constant 0 : index
      %25 = vector.load %arg7[%c0_20, %c0_21] : memref<16x128xf32, #tpu.memory_space<vmem>>, vector<16x128xf32>
      tpu.vector_store %arg7[%c0_20, %c0_21], %24 {strides = array<i32>} : memref<16x128xf32, #tpu.memory_space<vmem>>, vector<16x128xf32>,
    } else {
    }
    return
  }
  func.func @transform_0(%arg0: i32, %arg1: i32) -> (i32, i32) {
    %c0_i32 = arith.constant 0 : i32
    %c0_i32_0 = arith.constant 0 : i32
    return %arg0, %c0_i32 : i32, i32
  }
  func.func @transform_1(%arg0: i32, %arg1: i32) -> (i32, i32) {
    %c0_i32 = arith.constant 0 : i32
    %c0_i32_0 = arith.constant 0 : i32
    return %c0_i32, %arg1 : i32, i32
  }
  func.func @transform_2(%arg0: i32, %arg1: i32) -> (i32, i32) {
    %c0_i32 = arith.constant 0 : i32
    %c0_i32_0 = arith.constant 0 : i32
    return %c0_i32, %arg1 : i32, i32
  }
  func.func @transform_3(%arg0: i32, %arg1: i32) -> (i32, i32) {
    %c0_i32 = arith.constant 0 : i32
    %c0_i32_0 = arith.constant 0 : i32
    return %arg1, %c0_i32 : i32, i32
  }
  func.func @transform_4(%arg0: i32, %arg1: i32) -> (i32, i32) {
    %c0_i32 = arith.constant 0 : i32
    %c0_i32_0 = arith.constant 0 : i32
    %c0_i32_1 = arith.constant 0 : i32
    return %c0_i32, %c0_i32_0 : i32, i32
  }
  func.func @transform_5(%arg0: i32, %arg1: i32) -> (i32, i32) {
    %c0_i32 = arith.constant 0 : i32
    %c0_i32_0 = arith.constant 0 : i32
    return %arg0, %c0_i32 : i32, i32
  }
}

</mosaic_0001>

<llo_original>
// kernel: tpu_custom_call.1
$region0: #{tpu_custom_call.1}
  #allocation0 [shape = 'u32[]', space=smem, size = 0x4, offset = 0x4, fixed_abs, tag = 'smem constant byte address 0x4 - core index']
  #allocation1 [shape = 'u32[72,128]{1,0:T(1,128)}', space=vmem, size = 0x9000, scoped, tag = 'internal scratch']
  #allocation2 [shape = 'f32[16,128]{1,0:T(8,128)}', space=vmem, size = 0x2000, scoped, tag = 'scratch operand']
  %s0 = inlined_call_operand.hbm [shape: f32[16,32], index: 0, kind: input, shape index: {}]
  %s1 = inlined_call_operand.hbm [shape: bf16[32,128], index: 1, kind: input, shape index: {}]
  %s2 = inlined_call_operand.vmem [shape: f32[1,128], index: 2, kind: input, shape index: {}]
  %s3 = inlined_call_operand.hbm [shape: bf16[128,128], index: 3, kind: input, shape index: {}]
  %s4 = inlined_call_operand.vmem [shape: f32[1,128], index: 4, kind: input, shape index: {}]
  %s5 = inlined_call_operand.hbm [shape: f32[16,128], index: 5, kind: output, shape index: {}]
  %s6 = sld [smem:[#allocation0]]
  $region50: #{tpu_custom_call.1} parent=0
    _
  %s8 = ssub.s32 1, %s6
  %s9 = scalar_select 0, %s8, %s6
  $region1: #{tpu_custom_call.1} parent=0
    #allocation3 [shape = 'u8[8192]{0}', space=vmem, size = 0x2000, scoped, tag = 'input window, operand 0, single buffered']
    #allocation4 [shape = 's32[1]{0}', space=sflag, size = 0x4, scoped, tag = 'scoped memory for tpu_custom_call.1']
    #allocation5 [shape = 's32[1]{0}', space=sflag, size = 0x4, scoped, tag = 'scoped memory for tpu_custom_call.1']
    #allocation6 [shape = 'u8[8192]{0}', space=vmem, size = 0x2000, scoped, tag = 'input window, operand 1, single buffered']
    #allocation7 [shape = 's32[1]{0}', space=sflag, size = 0x4, scoped, tag = 'scoped memory for tpu_custom_call.1']
    #allocation8 [shape = 'u8[32768]{0}', space=vmem, size = 0x8000, scoped, tag = 'input window, operand 3, single buffered']
    #allocation9 [shape = 'u8[8192]{0}', space=vmem, size = 0x2000, scoped, tag = 'output window, operand 0, single buffered']
    %10 = vsyncpa [#allocation4], 0
    %11 = vsyncpa [#allocation7], 0
    %12 = vsyncpa [#allocation5], 0
    // Predicated region
    $region2: #{tpu_custom_call.1} parent=1 // pred_check
      _
    $region3: #{tpu_custom_call.1} parent=1 // pred_check_branch
      %14 = sbr.rel (0) target = $region5
    $region4: #{tpu_custom_call.1} parent=1 // pred_region
      %16 = vsyncadd [#allocation4], 0
      %s17 = sshll.u32 %s0, 4
      %s18 = int_to_ptr.hbm [resolvable:$true] %s17
      %s19 = sshll.u32 [#allocation3], 4
      %s20 = int_to_ptr.vmem [resolvable:$true] %s19
      %25 = dma.hbm_to_vmem [thread:$0]  %s18, 256, %s20, [#allocation4], 128, 128, 8
    $region5: #{tpu_custom_call.1} parent=1 // pred_fallthru
      _
    // Predicated region
    $region6: #{tpu_custom_call.1} parent=1 // pred_check
      _
    $region7: #{tpu_custom_call.1} parent=1 // pred_check_branch
      %27 = sbr.rel (0) target = $region9
    $region8: #{tpu_custom_call.1} parent=1 // pred_region
      %29 = vsyncadd [#allocation7], 0
      %s30 = sshll.u32 %s1, 4
      %s31 = int_to_ptr.hbm [resolvable:$true] %s30
      %s32 = sshll.u32 [#allocation6], 4
      %s33 = int_to_ptr.vmem [resolvable:$true] %s32
      %38 = dma.hbm_to_vmem [thread:$0]  %s31, 256, %s33, [#allocation7], 64, 64, 4
    $region9: #{tpu_custom_call.1} parent=1 // pred_fallthru
      _
    // Predicated region
    $region10: #{tpu_custom_call.1} parent=1 // pred_check
      _
    $region11: #{tpu_custom_call.1} parent=1 // pred_check_branch
      %40 = sbr.rel (0) target = $region13
    $region12: #{tpu_custom_call.1} parent=1 // pred_region
      _
    $region13: #{tpu_custom_call.1} parent=1 // pred_fallthru
      _
    // Predicated region
    $region14: #{tpu_custom_call.1} parent=1 // pred_check
      _
    $region15: #{tpu_custom_call.1} parent=1 // pred_check_branch
      %42 = sbr.rel (0) target = $region17
    $region16: #{tpu_custom_call.1} parent=1 // pred_region
      %44 = vsyncadd [#allocation7], 0
      %s45 = sshll.u32 %s3, 4
      %s46 = int_to_ptr.hbm [resolvable:$true] %s45
      %s47 = sshll.u32 [#allocation8], 4
      %s48 = int_to_ptr.vmem [resolvable:$true] %s47
      %53 = dma.hbm_to_vmem [thread:$0]  %s46, 1024, %s48, [#allocation7], 64, 64, 4
    $region17: #{tpu_custom_call.1} parent=1 // pred_fallthru
      _
    // Predicated region
    $region18: #{tpu_custom_call.1} parent=1 // pred_check
      _
    $region19: #{tpu_custom_call.1} parent=1 // pred_check_branch
      %55 = sbr.rel (0) target = $region21
    $region20: #{tpu_custom_call.1} parent=1 // pred_region
      _
    $region21: #{tpu_custom_call.1} parent=1 // pred_fallthru
      _
    // Predicated region
    $region22: #{tpu_custom_call.1} parent=1 // pred_check
      _
    $region23: #{tpu_custom_call.1} parent=1 // pred_check_branch
      %57 = sbr.rel (0) target = $region25
    $region24: #{tpu_custom_call.1} parent=1 // pred_region
      %59 = dma.done [#allocation4], 256
    $region25: #{tpu_custom_call.1} parent=1 // pred_fallthru
      _
    // Predicated region
    $region26: #{tpu_custom_call.1} parent=1 // pred_check
      _
    $region27: #{tpu_custom_call.1} parent=1 // pred_check_branch
      %61 = sbr.rel (0) target = $region29
    $region28: #{tpu_custom_call.1} parent=1 // pred_region
      %63 = dma.done [#allocation7], 256
    $region29: #{tpu_custom_call.1} parent=1 // pred_fallthru
      _
    // Predicated region
    $region30: #{tpu_custom_call.1} parent=1 // pred_check
      _
    $region31: #{tpu_custom_call.1} parent=1 // pred_check_branch
      %65 = sbr.rel (0) target = $region33
    $region32: #{tpu_custom_call.1} parent=1 // pred_region
      %67 = dma.done [#allocation7], 1024
    $region33: #{tpu_custom_call.1} parent=1 // pred_fallthru
      _
    %p69 = scmp.eq.s32.totalorder 0, 0
    // Predicated region
    $region34: #{tpu_custom_call.1} parent=1 // pred_check
      %p70 = pneg %p69
    $region35: #{tpu_custom_call.1} parent=1 // pred_check_branch
      %72 = sbr.rel (%p70) target = $region37
    $region36: #{tpu_custom_call.1} parent=1 // pred_region
      %73 = vst [vmem:[#allocation2] sm:$0xff] 0.0
      %74 = vst [vmem:[#allocation2 + $0x8] sm:$0xff] 0.0
    $region37: #{tpu_custom_call.1} parent=1 // pred_fallthru
      _
    %v75 = vld [vmem:[#allocation3] sm:$0xff]
    %v76 = vld [vmem:[#allocation3 + $0x8] sm:$0xff]
    %v77 = vpack.c.bf16 %v76, %v75
    %v78 = vld [vmem:[#allocation6] sm:$0xf]
    %v79 = vld [vmem:[#allocation6 + $0x4] sm:$0xf]
    %v80 = vld [vmem:[#allocation6 + $0x8] sm:$0xf]
    %v81 = vld [vmem:[#allocation6 + $0xc] sm:$0xf]
    %v82 = vld [vmem:[%s2] sm:$0x1]
    %v84 = vperm.slane %v82, 0
    %v90 = vunpack.c.l.b16 %v78
    %v91 = vunpack.c.l.b16 %v79
    %v92 = vunpack.c.l.b16 %v80
    %v93 = vunpack.c.l.b16 %v81
    %v94 = vpack.c.b16 %v91, %v90
    %v95 = vpack.c.b16 %v93, %v92
    %vm98 = vcmask 261120
    %v100 = vsel %vm98, %v77, 0
    %102 = vmatpush.bf16.msra.mxu0 0
    %103 = vmatpush.bf16.msra.mxu0 0
    %104 = vmatpush.bf16.msra.mxu0 0
    %105 = vmatpush.bf16.msra.mxu0 0
    %106 = vmatpush.bf16.msra.mxu0 0
    %107 = vmatpush.bf16.msra.mxu0 0
    %108 = vmatpush.bf16.msra.mxu0 %v95
    %109 = vmatpush.bf16.msra.mxu0 %v94
    %110 = vmatmul.bf16.gmra.mxu0 %v100
    %v111 = vpop.f32.mrf.mxu0
    %v112 = vadd.f32 %v84, %v111
    %v113 = vpop.f32.mrf.mxu0
    %v114 = vadd.f32 %v84, %v113
    %115 = vdwg.mxu0
    %v116 = vmax.f32 %v112, 0.0
    %v117 = vmax.f32 %v114, 0.0
    %v118 = vld [vmem:[#allocation2] sm:$0xff]
    %v119 = vld [vmem:[#allocation2 + $0x8] sm:$0xff]
    %v120 = vpack.c.bf16 %v117, %v116
    %v121 = vld [vmem:[#allocation8] sm:$0xf]
    %v122 = vld [vmem:[#allocation8 + $0x4] sm:$0xf]
    %v123 = vld [vmem:[#allocation8 + $0x8] sm:$0xf]
    %v124 = vld [vmem:[#allocation8 + $0xc] sm:$0xf]
    %v125 = vld [vmem:[#allocation8 + $0x10] sm:$0xf]
    %v126 = vld [vmem:[#allocation8 + $0x14] sm:$0xf]
    %v127 = vld [vmem:[#allocation8 + $0x18] sm:$0xf]
    %v128 = vld [vmem:[#allocation8 + $0x1c] sm:$0xf]
    %v129 = vld [vmem:[#allocation8 + $0x20] sm:$0xf]
    %v130 = vld [vmem:[#allocation8 + $0x24] sm:$0xf]
    %v131 = vld [vmem:[#allocation8 + $0x28] sm:$0xf]
    %v132 = vld [vmem:[#allocation8 + $0x2c] sm:$0xf]
    %v133 = vld [vmem:[#allocation8 + $0x30] sm:$0xf]
    %v134 = vld [vmem:[#allocation8 + $0x34] sm:$0xf]
    %v135 = vld [vmem:[#allocation8 + $0x38] sm:$0xf]
    %v136 = vld [vmem:[#allocation8 + $0x3c] sm:$0xf]
    %v153 = vunpack.c.l.b16 %v121
    %v154 = vunpack.c.l.b16 %v122
    %v155 = vunpack.c.l.b16 %v123
    %v156 = vunpack.c.l.b16 %v124
    %v157 = vunpack.c.l.b16 %v125
    %v158 = vunpack.c.l.b16 %v126
    %v159 = vunpack.c.l.b16 %v127
    %v160 = vunpack.c.l.b16 %v128
    %v161 = vunpack.c.l.b16 %v129
    %v162 = vunpack.c.l.b16 %v130
    %v163 = vunpack.c.l.b16 %v131
    %v164 = vunpack.c.l.b16 %v132
    %v165 = vunpack.c.l.b16 %v133
    %v166 = vunpack.c.l.b16 %v134
    %v167 = vunpack.c.l.b16 %v135
    %v168 = vunpack.c.l.b16 %v136
    %v169 = vpack.c.b16 %v154, %v153
    %v170 = vpack.c.b16 %v156, %v155
    %v171 = vpack.c.b16 %v158, %v157
    %v172 = vpack.c.b16 %v160, %v159
    %v173 = vpack.c.b16 %v162, %v161
    %v174 = vpack.c.b16 %v164, %v163
    %v175 = vpack.c.b16 %v166, %v165
    %v176 = vpack.c.b16 %v168, %v167
    %185 = vmatpush.bf16.msra.mxu0 %v176
    %186 = vmatpush.bf16.msra.mxu0 %v175
    %187 = vmatpush.bf16.msra.mxu0 %v174
    %188 = vmatpush.bf16.msra.mxu0 %v173
    %189 = vmatpush.bf16.msra.mxu0 %v172
    %190 = vmatpush.bf16.msra.mxu0 %v171
    %191 = vmatpush.bf16.msra.mxu0 %v170
    %192 = vmatpush.bf16.msra.mxu0 %v169
    %193 = vmatmul.bf16.gmra.mxu0 %v120
    %v194 = vpop.f32.mrf.mxu0
    %v195 = vadd.f32 0.0, %v194
    %v196 = vpop.f32.mrf.mxu0
    %v197 = vadd.f32 0.0, %v196
    %198 = vdwg.mxu0
    %v199 = vadd.f32 %v118, %v195
    %v200 = vadd.f32 %v119, %v197
    %201 = vst [vmem:[#allocation2] sm:$0xff] %v199
    %202 = vst [vmem:[#allocation2 + $0x8] sm:$0xff] %v200
    // Predicated region
    $region38: #{tpu_custom_call.1} parent=1 // pred_check
      %p203 = pneg %p69
    $region39: #{tpu_custom_call.1} parent=1 // pred_check_branch
      %205 = sbr.rel (%p203) target = $region41
    $region40: #{tpu_custom_call.1} parent=1 // pred_region
      %v206 = vld [vmem:[#allocation2] sm:$0xff]
      %v207 = vld [vmem:[#allocation2 + $0x8] sm:$0xff]
      %v208 = vld [vmem:[%s4] sm:$0x1]
      %v210 = vperm.slane %v208, 0
      %v212 = vadd.f32 %v206, %v210
      %v213 = vadd.f32 %v207, %v210
      %214 = vst [vmem:[#allocation9] sm:$0xff] %v212
      %215 = vst [vmem:[#allocation9 + $0x8] sm:$0xff] %v213
    $region41: #{tpu_custom_call.1} parent=1 // pred_fallthru
      _
    // Predicated region
    $region42: #{tpu_custom_call.1} parent=1 // pred_check
      _
    $region43: #{tpu_custom_call.1} parent=1 // pred_check_branch
      %217 = sbr.rel (0) target = $region45
    $region44: #{tpu_custom_call.1} parent=1 // pred_region
      %219 = vsyncadd [#allocation5], 0
      %s220 = sshll.u32 [#allocation9], 4
      %s221 = int_to_ptr.vmem [resolvable:$true] %s220
      %s222 = sshll.u32 %s5, 4
      %s223 = int_to_ptr.hbm [resolvable:$true] %s222
      %228 = dma.vmem_to_hbm [thread:$0]  %s221, 256, %s223, [#allocation5], 128, 128, 8
    $region45: #{tpu_custom_call.1} parent=1 // pred_fallthru
      _
    // Predicated region
    $region46: #{tpu_custom_call.1} parent=1 // pred_check
      _
    $region47: #{tpu_custom_call.1} parent=1 // pred_check_branch
      %230 = sbr.rel (0) target = $region49
    $region48: #{tpu_custom_call.1} parent=1 // pred_region
      %232 = dma.done [#allocation5], 256
    $region49: #{tpu_custom_call.1} parent=1 // pred_fallthru
      _
    %233 = vsyncpa [#allocation4], 1
    %234 = vsyncpa [#allocation7], 1
    %235 = vsyncpa [#allocation5], 1

</llo_original>
